<compile_context>
chip_gen: v7x
topology: tpu7x:2x2x1
jax: 0.10.0
libtpu: 0.0.40
codegen_flags: <defaults>
</compile_context>

<pallas_src>
import numpy as np
import jax
import jax.numpy as jnp
from jax.experimental import pallas as pl
from jax.experimental.pallas import tpu as pltpu


def _round_up(x, m):
    return (x + m - 1) // m * m


def _cdiv(a, b):
    return -(-a // b)


def _vmem_budget_bytes():
    """Generation-aware VMEM budget for kernel buffers (v7x: 64 MiB physical /
    32 MiB scoped default; v5e/v6e: 128 MiB).  Stay well inside everywhere."""
    cap = 128 << 20
    try:
        cap = int(getattr(pltpu.get_tpu_info(), "vmem_capacity_bytes", cap))
    except Exception:           # query unavailable -> stay conservative
        cap = 64 << 20
    return max(min(cap // 8, 32 << 20), 4 << 20)


# ----------------------------- Pallas: linear -----------------------------

def _linear_kernel(x_ref, w_ref, b_ref, o_ref):
    # f32 activations cast to bf16 in-kernel (drops one HBM pad/cast pass per
    # layer); bf16 weights; f32 accumulate on the MXU; f32 bias add.
    x = x_ref[...].astype(jnp.bfloat16)
    o_ref[...] = (jnp.dot(x, w_ref[...], preferred_element_type=jnp.float32)
                  + b_ref[...]).astype(o_ref.dtype)


def pallas_linear(x, w, b, tm_max=256):
    """y = x @ w + b.   x: (M, K) f32, w: (K, N), b: (N,).

    * M tiled on a "parallel" grid axis, >= 2 grid steps when M > 8 (v7x has 2 TCs).
    * K at full extent (legal full-dim block), so x needs no padding in HBM.
    * Only the tiny weight/bias are lane-padded (128, or 256 when N >= 256) so
      output stores are unmasked/lane-dense.
    NOTE: bf16 MXU operands (f32 accumulate) deviate from the f32 PyTorch reference
    by ~1e-3 relative; acceptable for audio."""
    M, K = x.shape
    N = w.shape[1]
    n_align = 256 if N >= 256 else 128
    Np = _round_up(N, n_align)

    if M <= tm_max:
        tm = M
        if M > 8:                                    # >= 2 parallel grid steps
            half = _round_up(_cdiv(M, 2), 8)
            if half < M:
                tm = half
    else:
        tm = tm_max
    grid_m = _cdiv(M, tm)

    wp = jnp.pad(w.astype(jnp.float32), ((0, 0), (0, Np - N))).astype(jnp.bfloat16)
    bp = jnp.pad(b.astype(jnp.float32).reshape(1, N), ((0, 0), (0, Np - N)))

    # TODO(synk): the constant-index weight/bias blocks could be single-buffered
    # (pipeline_mode=pl.Buffered(1)); they are tiny at frame rate, so the default
    # double-buffering is kept for maximum portability across jax versions.
    out = pl.pallas_call(
        _linear_kernel,
        out_shape=jax.ShapeDtypeStruct((M, Np), jnp.float32),
        grid=(grid_m,),
        in_specs=[pl.BlockSpec((tm, K), lambda i: (i, 0)),
                  pl.BlockSpec((K, Np), lambda i: (0, 0)),    # weight (revisited)
                  pl.BlockSpec((1, Np), lambda i: (0, 0))],   # bias   (revisited)
        out_specs=pl.BlockSpec((tm, Np), lambda i: (i, 0)),
        compiler_params=pltpu.CompilerParams(
            dimension_semantics=("parallel",)),
    )(x.astype(jnp.float32), wp, bp)
    return out[:, :N]


# ----------------------------- Pallas: sinusoids -----------------------------

def _sinusoid_kernel(phase_ref, amp_ref, w_ref, o_ref):
    theta = phase_ref[0]                       # (1, t_tile)  lanes = time, f32
    a = amp_ref[0, 0]                          # (H, 2*f_tile) bf16: [amp_lo | amp_hi]
    n_harm = a.shape[0]

    # Fused frame->sample linear upsampling: ONE bf16 MXU matmul (K = 2*f_tile),
    # f32 accumulate.  amp: (H, t_tile) -- harmonics on sublanes, time on lanes.
    amp = jax.lax.dot_general(a, w_ref[...], (((1,), (0,)), ((), ())),
                              preferred_element_type=jnp.float32)

    # Harmonic bank via the Chebyshev sine recurrence
    #     sin((h+1)*theta) = 2*cos(theta)*sin(h*theta) - sin((h-1)*theta)
    # -> one sin + one cos per sample (EUP) instead of H transcendentals (which
    # saturate the VPU), with the accumulation fused into the unrolled recurrence
    # (no (H, t_tile) sine temporary, no XLU reduction).
    s_prev = jnp.zeros_like(theta)             # sin(0 * theta)
    s_cur = jnp.sin(theta)                     # sin(1 * theta)
    two_cos = 2.0 * jnp.cos(theta)
    acc = amp[0:1, :] * s_cur                  # harmonic level 1
    for h in range(1, n_harm):                 # unrolled at trace time (static H)
        s_next = two_cos * s_cur - s_prev
        acc = acc + amp[h:h + 1, :] * s_next
        s_prev, s_cur = s_cur, s_next
    o_ref[0] = acc


def _choose_sinusoid_tile(F, H, blk):
    """Pick f_tile frames per grid step -> t_tile = f_tile*blk samples on lanes.

    Constraints: t_tile % 128 == 0 (unless one tile covers the clip); f_tile <= 128
    (the block-diagonal interpolation weight does ~f_tile/2 x redundant MXU work);
    double-buffered weight + phase/out tiles + the (H, t_tile) f32 amp intermediate
    stay inside the per-generation VMEM budget."""
    budget = _vmem_budget_bytes()
    step = 128 // int(np.gcd(int(blk), 128))    # smallest f with f*blk % 128 == 0
    f_cap = 128
    best = 0
    f = step
    while f <= f_cap:
        t = f * blk
        weight_b = 2 * (2 * f) * t * 2          # bf16 interp weight, double-buffered
        stream_b = 2 * 2 * t * 4                # phase + output tiles (f32, 2 bufs)
        interm_b = 2 * H * t * 4                # (H, t) f32 amp intermediate + slack
        if t > (1 << 15) or weight_b + stream_b + interm_b > budget:
            break
        best = f
        f += step
    if best == 0:
        best = step
        # TODO(synk): for extreme block_size even one lane-aligned frame group may
        # exceed the VMEM budget; would need intra-frame time tiling.
    if F <= best:
        best = F                                # one tile over the whole clip
    return best, best * blk


def pallas_sinusoids(phase, amp_frames, blk):
    """sum_h upsample(amp_frames, blk)[..., h] * sin(phase * (h + 1)).

    phase: (B, T) f32 with T = F * blk;  amp_frames: (B, F, H) f32.
    The linear frame->sample interpolation of the amplitudes is fused into the
    kernel (no (B, T, H) HBM tensor).
    NOTE: bf16 amplitudes / interpolation weights give ~1e-3 relative quantisation;
    the fractions k/blk are exact in bf16 for power-of-two block_size."""
    B, T = phase.shape
    F, H = amp_frames.shape[1], amp_frames.shape[2]
    assert T == F * blk

    f_tile, t_tile = _choose_sinusoid_tile(F, H, blk)
    n_tiles = _cdiv(F, f_tile)
    F_pad, T_pad = n_tiles * f_tile, n_tiles * t_tile

    a_lo = amp_frames                                                     # frame k
    a_hi = jnp.concatenate([amp_frames[:, 1:], amp_frames[:, -1:]], 1)    # frame k+1
    if F_pad != F:
        a_lo = jnp.pad(a_lo, ((0, 0), (0, F_pad - F), (0, 0)))
        a_hi = jnp.pad(a_hi, ((0, 0), (0, F_pad - F), (0, 0)))
        phase = jnp.pad(phase, ((0, 0), (0, T_pad - T)))

    # Per-tile stacked amplitudes (B, n_tiles, H, 2*f_tile): harmonics on sublanes,
    # frames on the lane axis (lane-dense DMA, no relayout before the MXU); lo/hi
    # halves stacked along the contraction axis so a single matmul interpolates.
    a_lo_t = a_lo.reshape(B, n_tiles, f_tile, H).transpose(0, 1, 3, 2)
    a_hi_t = a_hi.reshape(B, n_tiles, f_tile, H).transpose(0, 1, 3, 2)
    a_cat = jnp.concatenate([a_lo_t, a_hi_t], axis=-1).astype(jnp.bfloat16)

    # Block-diagonal frames->samples interpolation weights, stacked [w_lo; w_hi],
    # built once host-side in bf16 (same constant block for every grid step).
    frac = np.arange(blk, dtype=np.float32) / float(blk)
    eye = np.eye(f_tile, dtype=np.float32)
    w_cat = jnp.asarray(
        np.concatenate([np.kron(eye, (1.0 - frac)[None, :]),
                        np.kron(eye, frac[None, :])], axis=0),
        dtype=jnp.bfloat16)                                    # (2*f_tile, t_tile)

    out = pl.pallas_call(
        _sinusoid_kernel,
        out_shape=jax.ShapeDtypeStruct((B, 1, T_pad), jnp.float32),
        grid=(B, n_tiles),
        in_specs=[pl.BlockSpec((1, 1, t_tile), lambda b, t: (b, 0, t)),
                  pl.BlockSpec((1, 1, H, 2 * f_tile), lambda b, t: (b, t, 0, 0)),
                  pl.BlockSpec((2 * f_tile, t_tile), lambda b, t: (0, 0))],
        out_specs=pl.BlockSpec((1, 1, t_tile), lambda b, t: (b, 0, t)),
        compiler_params=pltpu.CompilerParams(
            dimension_semantics=("parallel", "parallel")),
    )(phase[:, None, :].astype(jnp.float32), a_cat, w_cat)
    return out[:, 0, :T]


# ----------------------------- DSP glue (plain JAX) -----------------------------

def upsample(x, factor):
    """x: (B, F, C) -> (B, F*factor, C). Matches torch linear interp with
    align_corners=True on the last-frame-extended signal."""
    B, F, _ = x.shape
    x_ext = jnp.concatenate([x, x[:, -1:, :]], axis=1)        # (B, F+1, C)
    pos = jnp.arange(F * factor, dtype=jnp.float32) / factor
    i0 = jnp.floor(pos).astype(jnp.int32)
    frac = (pos - i0.astype(jnp.float32))[None, :, None]
    x0 = x_ext[:, i0, :]
    x1 = x_ext[:, i0 + 1, :]
    return x0 + frac * (x1 - x0)


def fo_to_rot(f0, sampling_rate, initial_phase=None, infer=True):
    # rotation (phase / 2pi) from instantaneous frequency.
    # NOTE: f32 cumsum over very long clips accumulates rounding error; acceptable
    # at these sizes (the wrap below keeps sin() of harmonic multiples exact).
    rot = jnp.cumsum(f0 / sampling_rate, axis=1)
    if initial_phase is not None:
        rot = rot + initial_phase[:, None] / (2.0 * np.pi)
    rot = rot - jnp.round(rot)        # wrap; sin() of any harmonic multiple unchanged
    return rot


def remove_above_fmax(amplitudes, pitch, fmax, level_start=1):
    n_harm = amplitudes.shape[-1]
    levels = jnp.arange(level_start, n_harm + level_start, dtype=amplitudes.dtype)
    pitches = pitch * levels                                  # (B, F, H)
    aa = (pitches < fmax).astype(amplitudes.dtype) + 1e-7
    return amplitudes * aa


def frequency_filter(audio, kernel_c, block_size, hann_window=True):
    """Frame-wise FIR filtering via FFT + vectorised overlap-add.
    audio: (B, T) f32, kernel_c: (B, n_frames, n_mag) complex64."""
    # TODO(synk): FFT-domain filtering kept in plain JAX (no Pallas FFT primitive).
    B, T = audio.shape
    n_frames, n_mag = kernel_c.shape[1], kernel_c.shape[2]
    win_len = 2 * (n_mag - 1)
    ir = jnp.fft.irfft(kernel_c, axis=-1)                     # (B, n_frames, win_len)
    ir = jnp.fft.fftshift(ir, axes=-1)                        # zero-phase IR -> centered
    if hann_window:
        win = 0.5 - 0.5 * jnp.cos(2.0 * np.pi * jnp.arange(win_len) / win_len)
        ir = ir * win.astype(ir.dtype)
    frames = audio.reshape(B, n_frames, block_size)
    fft_len = int(2 ** np.ceil(np.log2(block_size + win_len)))
    spec = jnp.fft.rfft(frames, n=fft_len, axis=-1) * jnp.fft.rfft(ir, n=fft_len, axis=-1)
    y = jnp.fft.irfft(spec, n=fft_len, axis=-1)               # (B, n_frames, fft_len)

    # Vectorised overlap-add (hop = block_size): split each fft_len frame into
    # R = ceil(fft_len/hop) hop-sized chunks and add R shifted frame-axis copies,
    # instead of a Python loop of n_frames dynamic-update-slices.
    hop = block_size
    R = _cdiv(fft_len, hop)
    y_pad = jnp.pad(y, ((0, 0), (0, 0), (0, R * hop - fft_len)))
    y_r = y_pad.reshape(B, n_frames, R, hop)
    out = jnp.zeros((B, n_frames + R, hop), dtype=audio.dtype)
    for r in range(R):                                        # R is small (~fft_len/hop)
        out = out.at[:, r:r + n_frames].add(y_r[:, :, r])
    out = out.reshape(B, (n_frames + R) * hop)
    delay = win_len // 2
    return out[:, delay:delay + T]


# ----------------------------- Unit2Control (simplified) -----------------------------

def init_unit2control_params(key, n_unit, n_hidden, n_spk, n_out):
    ks = jax.random.split(key, 8)

    def dense(k, fan_in, fan_out, scale=1.0):
        return scale * jax.random.normal(k, (fan_in, fan_out), jnp.float32) / np.sqrt(fan_in)

    p = {
        'conv1_w': jax.random.normal(ks[0], (n_hidden, n_unit, 3), jnp.float32) / np.sqrt(3 * n_unit),
        'conv1_b': jnp.zeros((n_hidden,), jnp.float32),
        'gn_gamma': jnp.ones((n_hidden,), jnp.float32),
        'gn_beta': jnp.zeros((n_hidden,), jnp.float32),
        'conv2_w': jax.random.normal(ks[1], (n_hidden, n_hidden, 3), jnp.float32) / np.sqrt(3 * n_hidden),
        'conv2_b': jnp.zeros((n_hidden,), jnp.float32),
        'f0_w': dense(ks[2], 1, n_hidden), 'f0_b': jnp.zeros((n_hidden,), jnp.float32),
        'phase_w': dense(ks[3], 1, n_hidden), 'phase_b': jnp.zeros((n_hidden,), jnp.float32),
        'vol_w': dense(ks[4], 1, n_hidden), 'vol_b': jnp.zeros((n_hidden,), jnp.float32),
        'ln_gamma': jnp.ones((n_hidden,), jnp.float32),
        'ln_beta': jnp.zeros((n_hidden,), jnp.float32),
        'out_w': dense(ks[5], n_hidden, n_out, scale=0.1),
        'out_b': jnp.zeros((n_out,), jnp.float32),
    }
    if n_spk > 1:
        p['spk_embed'] = 0.02 * jax.random.normal(ks[6], (n_spk, n_hidden), jnp.float32)
    return p


def conv1d_same3(x, w, b):
    """PyTorch Conv1d(Cin, Cout, 3, padding=1) on channel-last x via im2col + Pallas matmul."""
    # TODO(synk): im2col materialises a (B, F, 3*Cin) frame-rate tensor; cheap at frame
    # rate but could be removed with per-tap shifted in_specs + in-kernel accumulation.
    B, F, Cin = x.shape
    Cout = w.shape[0]
    xp = jnp.pad(x, ((0, 0), (1, 1), (0, 0)))
    cols = jnp.concatenate([xp[:, 0:F], xp[:, 1:F + 1], xp[:, 2:F + 2]], axis=-1)  # (B, F, 3*Cin)
    wm = jnp.transpose(w, (2, 1, 0)).reshape(3 * Cin, Cout)   # row = tap*Cin + ci
    y = pallas_linear(cols.reshape(B * F, 3 * Cin), wm, b)
    return y.reshape(B, F, Cout)


def group_norm(x, num_groups, gamma, beta, eps=1e-5):
    B, F, C = x.shape
    xg = x.reshape(B, F, num_groups, C // num_groups)
    mean = xg.mean(axis=(1, 3), keepdims=True)
    var = xg.var(axis=(1, 3), keepdims=True)
    xg = (xg - mean) / jnp.sqrt(var + eps)
    return xg.reshape(B, F, C) * gamma + beta


def layer_norm(x, gamma, beta, eps=1e-5):
    mean = x.mean(-1, keepdims=True)
    var = x.var(-1, keepdims=True)
    return (x - mean) / jnp.sqrt(var + eps) * gamma + beta


def embed1(v, w, b):
    # Linear(1, n_hidden) is an outer product; trivial elementwise glue.
    return v[..., None] * w[0] + b


def unit2control(params, units, f0, phase_frames, volume, spk_id,
                 n_spk, n_hidden, output_splits):
    B, F, _ = units.shape
    x = conv1d_same3(units, params['conv1_w'], params['conv1_b'])
    x = group_norm(x, 4, params['gn_gamma'], params['gn_beta'])
    x = jnp.where(x >= 0, x, 0.01 * x)                         # LeakyReLU
    x = conv1d_same3(x, params['conv2_w'], params['conv2_b'])
    x = x + embed1(jnp.log1p(f0[..., 0] / 700.0), params['f0_w'], params['f0_b'])
    x = x + embed1(phase_frames / np.pi, params['phase_w'], params['phase_b'])
    x = x + embed1(volume, params['vol_w'], params['vol_b'])
    if n_spk > 1:
        x = x + params['spk_embed'][spk_id][:, None, :]
    # TODO(synk): PCmer attention decoder of the original Unit2Control is not specified
    # in the provided source and is omitted here.
    x = layer_norm(x, params['ln_gamma'], params['ln_beta'])
    e = pallas_linear(x.reshape(B * F, n_hidden),
                      params['out_w'], params['out_b']).reshape(B, F, -1)
    ctrls, off = {}, 0
    for name, size in output_splits.items():
        ctrls[name] = e[..., off:off + size]
        off += size
    return ctrls


# ----------------------------- Sins forward -----------------------------

def sins_forward(params, cfg, units_frames, f0_frames, volume_frames, spk_id,
                 initial_phase=None, infer=True, noise_key=None):
    sr, blk = cfg['sampling_rate'], cfg['block_size']

    f0 = upsample(f0_frames, blk)[..., 0]                      # (B, T)
    phase = 2.0 * np.pi * fo_to_rot(f0, sr, initial_phase, infer)   # (B, T)
    phase_frames = phase[:, ::blk]                             # (B, F)

    ctrls = unit2control(params, units_frames, f0_frames, phase_frames,
                         volume_frames, spk_id, cfg['n_spk'], cfg['n_hidden'],
                         cfg['output_splits'])

    amplitudes_frames = jnp.exp(ctrls['amplitudes']) / 128.0
    group_delay = np.pi * jnp.tanh(ctrls['group_delay'])
    noise_param = jnp.exp(ctrls['noise_magnitude']) / 128.0
    amplitudes_frames = remove_above_fmax(amplitudes_frames, f0_frames,
                                          sr / 2.0, level_start=1)

    # Harmonic additive synthesis (sample-rate hot path) in Pallas.  The amplitude
    # block_size upsampling and PyTorch's max_upsample_dim chunking are fused into /
    # subsumed by the kernel; results are identical up to bf16 amplitude quantisation.
    sinusoids = pallas_sinusoids(phase, amplitudes_frames, blk)     # (B, T)

    harmonic = frequency_filter(
        sinusoids, jnp.exp(1j * jnp.cumsum(group_delay, axis=-1)), blk,
        hann_window=False)
    noise = jax.random.uniform(noise_key, harmonic.shape, jnp.float32) * 2.0 - 1.0
    noise = frequency_filter(noise, noise_param.astype(jnp.complex64), blk,
                             hann_window=True)
    signal = harmonic + noise
    return signal, phase[..., None], (harmonic, noise)


# ----------------------------- main -----------------------------

if __name__ == "__main__":
    sampling_rate = 16000
    block_size = 8
    n_harmonics = 8
    n_mag_allpass = 9
    n_mag_noise = 9
    n_unit = 32
    n_spk = 1
    n_hidden = 64
    B, F = 2, 8

    output_splits = {'amplitudes': n_harmonics,
                     'group_delay': n_mag_allpass,
                     'noise_magnitude': n_mag_noise}
    n_out = sum(output_splits.values())

    key = jax.random.PRNGKey(0)
    kp, ku, kf, kv, kn = jax.random.split(key, 5)
    params = init_unit2control_params(kp, n_unit, n_hidden, n_spk, n_out)

    units_frames = jax.random.normal(ku, (B, F, n_unit), jnp.float32)
    f0_frames = jax.random.uniform(kf, (B, F, 1), jnp.float32, 100.0, 400.0)
    volume_frames = jax.random.uniform(kv, (B, F), jnp.float32)
    spk_id = jnp.zeros((B,), jnp.int32)

    cfg = dict(sampling_rate=sampling_rate, block_size=block_size,
               n_spk=n_spk, n_hidden=n_hidden, output_splits=output_splits)

    signal, phase, (harmonic, noise) = sins_forward(
        params, cfg, units_frames, f0_frames, volume_frames, spk_id,
        initial_phase=None, infer=True, noise_key=kn)

    jax.block_until_ready((signal, phase, harmonic, noise))
    assert signal.shape == (B, F * block_size)
    assert phase.shape == (B, F * block_size, 1)
    assert harmonic.shape == (B, F * block_size)
    assert noise.shape == (B, F * block_size)
    assert bool(jnp.all(jnp.isfinite(signal)))
    print("KERNEL_OK")
</pallas_src>

<mosaic_0001>
module attributes {stable_mosaic.version = 11 : i64} {
  func.func @_linear_kernel(%arg0: i32, %arg1: memref<8x96xf32, #tpu.memory_space<vmem>>, %arg2: memref<96x128xbf16, #tpu.memory_space<vmem>>, %arg3: memref<1x128xf32, #tpu.memory_space<vmem>>, %arg4: memref<8x128xf32, #tpu.memory_space<vmem>>) attributes {dimension_semantics = [#tpu.dimension_semantics<parallel>], iteration_bounds = array<i64: 2>, scalar_prefetch = 0 : i64, scratch_operands = 0 : i64, tpu.core_type = #tpu.core_type<tc>, window_params = [{transform_indices = @transform_0, window_bounds = array<i64: 8, 96>}, {pipeline_mode = #tpu.pipeline_mode<synchronous>, transform_indices = @transform_1, window_bounds = array<i64: 96, 128>}, {pipeline_mode = #tpu.pipeline_mode<synchronous>, transform_indices = @transform_2, window_bounds = array<i64: 1, 128>}, {transform_indices = @transform_3, window_bounds = array<i64: 8, 128>}]} {
    %c0 = arith.constant 0 : index
    %c0_0 = arith.constant 0 : index
    %0 = vector.load %arg1[%c0, %c0_0] : memref<8x96xf32, #tpu.memory_space<vmem>>, vector<8x96xf32>
    %1 = arith.truncf %0 : vector<8x96xf32> to vector<8x96xbf16>
    %c0_1 = arith.constant 0 : index
    %c0_2 = arith.constant 0 : index
    %2 = vector.load %arg2[%c0_1, %c0_2] : memref<96x128xbf16, #tpu.memory_space<vmem>>, vector<96x128xbf16>
    %cst = arith.constant dense<0.000000e+00> : vector<8x128xf32>
    %3 = tpu.matmul %1, %2, %cst {dimension_numbers = #tpu.dot_dimension_numbers<[1], [0], [0], [1], [0, 0, 1, 1], [], []>} : vector<8x96xbf16>, vector<96x128xbf16>, vector<8x128xf32> -> vector<8x128xf32>
    %c0_3 = arith.constant 0 : index
    %c0_4 = arith.constant 0 : index
    %4 = vector.load %arg3[%c0_3, %c0_4] : memref<1x128xf32, #tpu.memory_space<vmem>>, vector<1x128xf32>
    %5 = vector.broadcast %4 : vector<1x128xf32> to vector<8x128xf32>
    %6 = arith.addf %3, %5 : vector<8x128xf32>
    %c0_5 = arith.constant 0 : index
    %c0_6 = arith.constant 0 : index
    %7 = vector.load %arg4[%c0_5, %c0_6] : memref<8x128xf32, #tpu.memory_space<vmem>>, vector<8x128xf32>
    tpu.vector_store %arg4[%c0_5, %c0_6], %6 {strides = array<i32>} : memref<8x128xf32, #tpu.memory_space<vmem>>, vector<8x128xf32>,
    return
  }
  func.func @transform_0(%arg0: i32) -> (i32, i32) {
    %c0_i32 = arith.constant 0 : i32
    %c0_i32_0 = arith.constant 0 : i32
    return %arg0, %c0_i32 : i32, i32
  }
  func.func @transform_1(%arg0: i32) -> (i32, i32) {
    %c0_i32 = arith.constant 0 : i32
    %c0_i32_0 = arith.constant 0 : i32
    %c0_i32_1 = arith.constant 0 : i32
    return %c0_i32, %c0_i32_0 : i32, i32
  }
  func.func @transform_2(%arg0: i32) -> (i32, i32) {
    %c0_i32 = arith.constant 0 : i32
    %c0_i32_0 = arith.constant 0 : i32
    %c0_i32_1 = arith.constant 0 : i32
    return %c0_i32, %c0_i32_0 : i32, i32
  }
  func.func @transform_3(%arg0: i32) -> (i32, i32) {
    %c0_i32 = arith.constant 0 : i32
    %c0_i32_0 = arith.constant 0 : i32
    return %arg0, %c0_i32 : i32, i32
  }
}

</mosaic_0001>

<llo_original>
// kernel: tpu_custom_call.1
$region0: #{tpu_custom_call.1}
  #allocation0 [shape = 'u32[]', space=smem, size = 0x4, offset = 0x4, fixed_abs, tag = 'smem constant byte address 0x4 - core index']
  #allocation1 [shape = 'u32[144,128]{1,0:T(1,128)}', space=vmem, size = 0x12000, scoped, tag = 'internal scratch']
  %s0 = inlined_call_operand.hbm [shape: f32[16,96], index: 0, kind: input, shape index: {}]
  %s1 = inlined_call_operand.hbm [shape: bf16[96,128], index: 1, kind: input, shape index: {}]
  %s2 = inlined_call_operand.vmem [shape: f32[1,128], index: 2, kind: input, shape index: {}]
  %s3 = inlined_call_operand.hbm [shape: f32[16,128], index: 3, kind: output, shape index: {}]
  %s4 = sld [smem:[#allocation0]]
  $region53: #{tpu_custom_call.1} parent=0
    _
  %s6 = ssub.s32 1, %s4
  %s7 = scalar_select 0, %s6, %s4
  $region1: #{tpu_custom_call.1} parent=0
    #allocation2 [shape = 'u8[8192]{0}', space=vmem, size = 0x2000, scoped, tag = 'input window, operand 0']
    #allocation3 [shape = 's32[2]{0}', space=sflag, size = 0x8, scoped, tag = 'scoped memory for tpu_custom_call.1']
    #allocation4 [shape = 's32[2]{0}', space=sflag, size = 0x8, scoped, tag = 'scoped memory for tpu_custom_call.1']
    #allocation5 [shape = 'u8[24576]{0}', space=vmem, size = 0x6000, scoped, tag = 'input window, operand 1, single buffered']
    #allocation6 [shape = 's32[1]{0}', space=sflag, size = 0x4, scoped, tag = 'scoped memory for tpu_custom_call.1']
    #allocation7 [shape = 'u8[8192]{0}', space=vmem, size = 0x2000, scoped, tag = 'output window, operand 0']
    %8 = vsyncpa [#allocation3], 0
    %s9 = scalar_lea.sflag [#allocation3], 1
    %10 = vsyncpa %s9, 0
    %11 = vsyncpa [#allocation6], 0
    %12 = vsyncpa [#allocation4], 0
    %s13 = scalar_lea.sflag [#allocation4], 1
    %14 = vsyncpa %s13, 0
    loop: start=0, step=1, limit=4
    $region2: #{tpu_custom_call.1} parent=1 // loop_pre_header
      _
    $region3: #{tpu_custom_call.1} parent=1 // loop_header
      %s16 = sphi 0, %s20
      %p17 = scmp.ge.s32.totalorder %s16, 4
      %s26 = sphi 0, %s28
      %s29 = sphi 0, %s26
      %s30 = sphi 0, %s29
      %s46 = sphi 0, %s30
      %s50 = sphi 0, %s50
      %s52 = sphi 0, %s50
      %s53 = sphi 0, %s52
      %s67 = sphi 0, %s53
      %s71 = sphi 0, %s71
      %s73 = sphi 0, %s71
      %s74 = sphi 0, %s73
      %s88 = sphi 0, %s74
      %s94 = sphi 0, %s96
      %s97 = sphi 0, %s94
      %s98 = sphi 0, %s97
      %s114 = sphi 0, %s98
    $region4: #{tpu_custom_call.1} parent=1 // loop_header_branch
      %19 = sbr.rel (%p17) target = $region8
    $region5: #{tpu_custom_call.1} parent=1 // loop_body
      %s21 = ssub.s32 %s16, 1
      %s22 = ssub.s32 %s16, 2
      %s23 = sadd.s32 %s16, 1
      %s24 = ssub.s32 %s16, %s23
      %p25 = scmp.eq.s32.totalorder %s24, 0
      %s27 = sadd.s32 %s26, 1
      %s28 = scalar_select %p25, %s26, %s27
      %p31 = pneg %p25
      %p32 = scmp.eq.s32.totalorder %s16, 1
      %p33 = por %p31, %p32
      %p34 = scmp.ne.s32.totalorder %s26, %s29
      %p35 = scmp.eq.s32.totalorder %s16, 0
      %p36 = por %p34, %p35
      %p37 = scmp.ne.s32.totalorder %s26, %s29
      %p38 = scmp.eq.s32.totalorder %s21, 1
      %p39 = por %p37, %p38
      %p40 = scmp.ne.s32.totalorder %s29, %s30
      %p41 = scmp.eq.s32.totalorder %s21, 0
      %p42 = por %p40, %p41
      %p43 = scmp.ne.s32.totalorder %s29, %s30
      %p44 = scmp.eq.s32.totalorder %s22, 1
      %p45 = por %p43, %p44
      %p47 = scmp.ne.s32.totalorder %s30, %s46
      %p48 = scmp.eq.s32.totalorder %s22, 0
      %p49 = por %p47, %p48
      %s51 = sadd.s32 %s50, 1
      %p54 = scmp.eq.s32.totalorder %s16, 1
      %p55 = scmp.ne.s32.totalorder %s50, %s52
      %p56 = scmp.eq.s32.totalorder %s16, 0
      %p57 = por %p55, %p56
      %p58 = scmp.ne.s32.totalorder %s50, %s52
      %p59 = scmp.eq.s32.totalorder %s21, 1
      %p60 = por %p58, %p59
      %p61 = scmp.ne.s32.totalorder %s52, %s53
      %p62 = scmp.eq.s32.totalorder %s21, 0
      %p63 = por %p61, %p62
      %p64 = scmp.ne.s32.totalorder %s52, %s53
      %p65 = scmp.eq.s32.totalorder %s22, 1
      %p66 = por %p64, %p65
      %p68 = scmp.ne.s32.totalorder %s53, %s67
      %p69 = scmp.eq.s32.totalorder %s22, 0
      %p70 = por %p68, %p69
      %s72 = sadd.s32 %s71, 1
      %p75 = scmp.eq.s32.totalorder %s16, 1
      %p76 = scmp.ne.s32.totalorder %s71, %s73
      %p77 = scmp.eq.s32.totalorder %s16, 0
      %p78 = por %p76, %p77
      %p79 = scmp.ne.s32.totalorder %s71, %s73
      %p80 = scmp.eq.s32.totalorder %s21, 1
      %p81 = por %p79, %p80
      %p82 = scmp.ne.s32.totalorder %s73, %s74
      %p83 = scmp.eq.s32.totalorder %s21, 0
      %p84 = por %p82, %p83
      %p85 = scmp.ne.s32.totalorder %s73, %s74
      %p86 = scmp.eq.s32.totalorder %s22, 1
      %p87 = por %p85, %p86
      %p89 = scmp.ne.s32.totalorder %s74, %s88
      %p90 = scmp.eq.s32.totalorder %s22, 0
      %p91 = por %p89, %p90
      %s92 = ssub.s32 %s16, %s23
      %p93 = scmp.eq.s32.totalorder %s92, 0
      %s95 = sadd.s32 %s94, 1
      %s96 = scalar_select %p93, %s94, %s95
      %p99 = pneg %p93
      %p100 = scmp.eq.s32.totalorder %s16, 1
      %p101 = por %p99, %p100
      %p102 = scmp.ne.s32.totalorder %s94, %s97
      %p103 = scmp.eq.s32.totalorder %s16, 0
      %p104 = por %p102, %p103
      %p105 = scmp.ne.s32.totalorder %s94, %s97
      %p106 = scmp.eq.s32.totalorder %s21, 1
      %p107 = por %p105, %p106
      %p108 = scmp.ne.s32.totalorder %s97, %s98
      %p109 = scmp.eq.s32.totalorder %s21, 0
      %p110 = por %p108, %p109
      %p111 = scmp.ne.s32.totalorder %s97, %s98
      %p112 = scmp.eq.s32.totalorder %s22, 1
      %p113 = por %p111, %p112
      %p115 = scmp.ne.s32.totalorder %s98, %s114
      %p116 = scmp.eq.s32.totalorder %s22, 0
      %p117 = por %p115, %p116
      %p118 = scmp.le.s32.totalorder 1, %s16
      %p119 = scmp.lt.s32.totalorder %s16, 3
      %p120 = pnand %p118, %p119
      %p121 = pneg %p120
      // Predicated region
      $region9: #{tpu_custom_call.1} parent=5 // pred_check
        _
      $region10: #{tpu_custom_call.1} parent=5 // pred_check_branch
        %123 = sbr.rel (%p120) target = $region12
      $region11: #{tpu_custom_call.1} parent=5 // pred_region
        %s124 = ssub.s32 %s16, 1
        // Predicated region
        $region13: #{tpu_custom_call.1} parent=11 // pred_check
          %p125 = pneg %p63
        $region14: #{tpu_custom_call.1} parent=11 // pred_check_branch
          %127 = sbr.rel (%p125) target = $region16
        $region15: #{tpu_custom_call.1} parent=11 // pred_region
          %s129 = ssub.s32 768, 768
          %130 = vsyncadd [#allocation6], %s129
          %s131 = sshll.u32 [#allocation5], 4
          %s132 = int_to_ptr.vmem [resolvable:$true] %s131
          %137 = dma.hbm_to_vmem [thread:$0]  %s1, 768, %s132, [#allocation6], 64, 64, 4
        $region16: #{tpu_custom_call.1} parent=11 // pred_fallthru
          _
        // Predicated region
        $region17: #{tpu_custom_call.1} parent=11 // pred_check
          %p138 = pneg %p84
        $region18: #{tpu_custom_call.1} parent=11 // pred_check_branch
          %140 = sbr.rel (%p138) target = $region20
        $region19: #{tpu_custom_call.1} parent=11 // pred_region
          _
        $region20: #{tpu_custom_call.1} parent=11 // pred_fallthru
          _
      $region12: #{tpu_custom_call.1} parent=5 // pred_fallthru
        _
      %p141 = scmp.lt.s32.totalorder %s16, 2
      // Predicated region
      $region21: #{tpu_custom_call.1} parent=5 // pred_check
        %p142 = pneg %p141
      $region22: #{tpu_custom_call.1} parent=5 // pred_check_branch
        %144 = sbr.rel (%p142) target = $region24
      $region23: #{tpu_custom_call.1} parent=5 // pred_region
        // Predicated region
        $region25: #{tpu_custom_call.1} parent=23 // pred_check
          %p145 = pneg %p36
        $region26: #{tpu_custom_call.1} parent=23 // pred_check_branch
          %147 = sbr.rel (%p145) target = $region28
        $region27: #{tpu_custom_call.1} parent=23 // pred_region
          %s148 = sand.u32 %s26, 1
          %s149 = scalar_lea.sflag [#allocation3], %s148
          %s150 = sand.u32 %s26, 1
          %s151 = smul.addr %s150, 8
          %s152 = scalar_lea.vmem [#allocation2], %s151
          %s154 = ssub.s32 128, 128
          %155 = vsyncadd %s149, %s154
          %s156 = smul.addr %s16, 128
          %s157 = scalar_lea.hbm %s0, %s156
          %s159 = sshll.u32 %s152, 4
          %s160 = int_to_ptr.vmem [resolvable:$true] %s159
          %162 = dma.hbm_to_vmem [thread:$0]  %s157, 128, %s160, %s149
        $region28: #{tpu_custom_call.1} parent=23 // pred_fallthru
          _
      $region24: #{tpu_custom_call.1} parent=5 // pred_fallthru
        _
      %p163 = scmp.le.s32.totalorder 1, %s16
      %p164 = scmp.lt.s32.totalorder %s16, 3
      %p165 = pnand %p163, %p164
      %p166 = pneg %p165
      // Predicated region
      $region29: #{tpu_custom_call.1} parent=5 // pred_check
        _
      $region30: #{tpu_custom_call.1} parent=5 // pred_check_branch
        %168 = sbr.rel (%p165) target = $region32
      $region31: #{tpu_custom_call.1} parent=5 // pred_region
        %s169 = ssub.s32 %s16, 1
        %s170 = sand.u32 %s29, 1
        %s171 = scalar_lea.sflag [#allocation3], %s170
        %s172 = sand.u32 %s29, 1
        %s173 = smul.addr %s172, 8
        %s174 = scalar_lea.vmem [#allocation2], %s173
        // Predicated region
        $region33: #{tpu_custom_call.1} parent=31 // pred_check
          %p175 = pneg %p42
        $region34: #{tpu_custom_call.1} parent=31 // pred_check_branch
          %177 = sbr.rel (%p175) target = $region36
        $region35: #{tpu_custom_call.1} parent=31 // pred_region
          %178 = dma.done %s171, 128
        $region36: #{tpu_custom_call.1} parent=31 // pred_fallthru
          _
        // Predicated region
        $region37: #{tpu_custom_call.1} parent=31 // pred_check
          %p179 = pneg %p63
        $region38: #{tpu_custom_call.1} parent=31 // pred_check_branch
          %181 = sbr.rel (%p179) target = $region40
        $region39: #{tpu_custom_call.1} parent=31 // pred_region
          %182 = dma.done [#allocation6], 768
        $region40: #{tpu_custom_call.1} parent=31 // pred_fallthru
          _
        %s183 = sand.u32 %s29, 1
        %s184 = scalar_lea.sflag [#allocation3], %s183
        %s185 = sand.u32 %s29, 1
        %s186 = smul.addr %s185, 8
        %s187 = scalar_lea.vmem [#allocation2], %s186
        %p188 = pneg %p42
        %p189 = pneg %p39
        %p190 = pneg %p63
        %p191 = pneg %p60
        %p192 = pneg %p84
        %p193 = pneg %p81
        %p194 = pneg %p110
        %p195 = pneg %p107
        %s196 = sand.u32 %s97, 1
        %s197 = scalar_lea.sflag [#allocation4], %s196
        %s198 = sand.u32 %s97, 1
        %s199 = smul.addr %s198, 8
        %s200 = scalar_lea.vmem [#allocation7], %s199
        %v202 = vld [vmem:[%s174] sm:$0xff]
        %v203 = vpack.c.bf16 %v202, %v202
        %v204 = vld [vmem:[#allocation5] sm:$0xf]
        %v205 = vld [vmem:[#allocation5 + $0x4] sm:$0xf]
        %v206 = vld [vmem:[#allocation5 + $0x8] sm:$0xf]
        %v207 = vld [vmem:[#allocation5 + $0xc] sm:$0xf]
        %v208 = vld [vmem:[#allocation5 + $0x10] sm:$0xf]
        %v209 = vld [vmem:[#allocation5 + $0x14] sm:$0xf]
        %v210 = vld [vmem:[#allocation5 + $0x18] sm:$0xf]
        %v211 = vld [vmem:[#allocation5 + $0x1c] sm:$0xf]
        %v212 = vld [vmem:[#allocation5 + $0x20] sm:$0xf]
        %v213 = vld [vmem:[#allocation5 + $0x24] sm:$0xf]
        %v214 = vld [vmem:[#allocation5 + $0x28] sm:$0xf]
        %v215 = vld [vmem:[#allocation5 + $0x2c] sm:$0xf]
        %v216 = vld [vmem:[%s2] sm:$0x1]
        %v218 = vlaneseq
        %v219 = vshrl.u32 %v218, 7
        %v220 = vsub.s32 0, %v219
        %v221 = vrot.slane %v216, %v220
        %v235 = vunpack.c.l.b16 %v204
        %v236 = vunpack.c.l.b16 %v205
        %v237 = vunpack.c.l.b16 %v206
        %v238 = vunpack.c.l.b16 %v207
        %v239 = vunpack.c.l.b16 %v208
        %v240 = vunpack.c.l.b16 %v209
        %v241 = vunpack.c.l.b16 %v210
        %v242 = vunpack.c.l.b16 %v211
        %v243 = vunpack.c.l.b16 %v212
        %v244 = vunpack.c.l.b16 %v213
        %v245 = vunpack.c.l.b16 %v214
        %v246 = vunpack.c.l.b16 %v215
        %v247 = vpack.c.b16 %v236, %v235
        %v248 = vpack.c.b16 %v238, %v237
        %v249 = vpack.c.b16 %v240, %v239
        %v250 = vpack.c.b16 %v242, %v241
        %v251 = vpack.c.b16 %v244, %v243
        %v252 = vpack.c.b16 %v246, %v245
        %vm259 = vcmask 785408
        %v261 = vsel %vm259, %v203, 0
        %263 = vmatprep.subr.bf16.mxu0 0
        %264 = vmatpush1.bf16.msra.mxu0 %v247
        %265 = vmatprep.subr.bf16.mxu0 0
        %266 = vmatpush1.bf16.msra.mxu0 %v248
        %267 = vmatprep.subr.bf16.mxu0 0
        %268 = vmatpush1.bf16.msra.mxu0 %v249
        %269 = vmatprep.subr.bf16.mxu0 0
        %270 = vmatpush1.bf16.msra.mxu0 %v250
        %271 = vmatprep.subr.bf16.mxu0 0
        %272 = vmatpush1.bf16.msra.mxu0 %v251
        %273 = vmatprep.subr.bf16.mxu0 0
        %274 = vmatpush1.bf16.msra.mxu0 %v252
        %275 = vmatprep.subr.bf16.mxu0 0
        %276 = vmatpush1.bf16.msra.mxu0 0
        %277 = vmatprep.subr.bf16.mxu0 0
        %278 = vmatpush1.bf16.msra.mxu0 0
        %279 = vmatprep.subr.bf16.mxu0 0
        %280 = vmatpush1.bf16.msra.mxu0 0
        %281 = vmatprep.subr.bf16.mxu0 0
        %282 = vmatpush1.bf16.msra.mxu0 0
        %283 = vmatprep.subr.bf16.mxu0 0
        %284 = vmatpush1.bf16.msra.mxu0 0
        %285 = vmatprep.subr.bf16.mxu0 0
        %286 = vmatpush1.bf16.msra.mxu0 0
        %287 = vmatprep.subr.bf16.mxu0 0
        %288 = vmatpush1.bf16.msra.mxu0 0
        %289 = vmatprep.subr.bf16.mxu0 0
        %290 = vmatpush1.bf16.msra.mxu0 0
        %291 = vmatprep.subr.bf16.mxu0 0
        %292 = vmatpush1.bf16.msra.mxu0 0
        %293 = vmatprep.subr.bf16.mxu0 0
        %294 = vmatpush1.bf16.msra.mxu0 0
        %295 = vmatprep.mubr.bf16.mxu0 0
        %296 = vmatmul.mubr.bf16.gmra.mrb[0].mxu0 %v261
        %v297 = vpop.f32.mrb[0].mxu0
        %v298 = vadd.f32 %v221, %v297
        %v299 = vpop.f32.mrb[0].mxu0
        %v300 = vpop.f32.mrb[0].mxu0
        %v301 = vpop.f32.mrb[0].mxu0
        %302 = vdwg.mxu0
        %303 = vst [vmem:[%s200] sm:$0xff] %v298
        %s304 = sand.u32 %s97, 1
        %s305 = scalar_lea.sflag [#allocation4], %s304
        %s306 = sand.u32 %s97, 1
        %s307 = smul.addr %s306, 8
        %s308 = scalar_lea.vmem [#allocation7], %s307
        // Predicated region
        $region41: #{tpu_custom_call.1} parent=31 // pred_check
          %p309 = pneg %p107
        $region42: #{tpu_custom_call.1} parent=31 // pred_check_branch
          %311 = sbr.rel (%p309) target = $region44
        $region43: #{tpu_custom_call.1} parent=31 // pred_region
          %s313 = ssub.s32 128, 128
          %314 = vsyncadd %s305, %s313
          %s315 = smul.addr %s21, 128
          %s316 = scalar_lea.hbm %s3, %s315
          %s318 = sshll.u32 %s308, 4
          %s319 = int_to_ptr.vmem [resolvable:$true] %s318
          %321 = dma.vmem_to_hbm [thread:$0]  %s319, 128, %s316, %s305
        $region44: #{tpu_custom_call.1} parent=31 // pred_fallthru
          _
      $region32: #{tpu_custom_call.1} parent=5 // pred_fallthru
        _
      %p322 = scmp.le.s32.totalorder 2, %s16
      // Predicated region
      $region45: #{tpu_custom_call.1} parent=5 // pred_check
        %p323 = pneg %p322
      $region46: #{tpu_custom_call.1} parent=5 // pred_check_branch
        %325 = sbr.rel (%p323) target = $region48
      $region47: #{tpu_custom_call.1} parent=5 // pred_region
        %s326 = ssub.s32 %s16, 2
        // Predicated region
        $region49: #{tpu_custom_call.1} parent=47 // pred_check
          %p327 = pneg %p113
        $region50: #{tpu_custom_call.1} parent=47 // pred_check_branch
          %329 = sbr.rel (%p327) target = $region52
        $region51: #{tpu_custom_call.1} parent=47 // pred_region
          %s330 = sand.u32 %s98, 1
          %s331 = scalar_lea.sflag [#allocation4], %s330
          %s332 = sand.u32 %s98, 1
          %s333 = smul.addr %s332, 8
          %s334 = scalar_lea.vmem [#allocation7], %s333
          %335 = dma.done %s331, 128
        $region52: #{tpu_custom_call.1} parent=47 // pred_fallthru
          _
      $region48: #{tpu_custom_call.1} parent=5 // pred_fallthru
        _
    $region6: #{tpu_custom_call.1} parent=1 // loop_footer
      %s20 = sadd.s32 1, %s16
    $region7: #{tpu_custom_call.1} parent=1 // loop_footer_branch
      %15 = sbr.rel target = $region3
    $region8: #{tpu_custom_call.1} parent=1 // loop_exit
      _
    %336 = vsyncpa [#allocation3], 1
    %s337 = scalar_lea.sflag [#allocation3], 1
    %338 = vsyncpa %s337, 1
    %339 = vsyncpa [#allocation6], 1
    %340 = vsyncpa [#allocation4], 1
    %s341 = scalar_lea.sflag [#allocation4], 1
    %342 = vsyncpa %s341, 1

</llo_original>
